<compile_context>
chip_gen: v5e
topology: v5e:2x2
jax: 0.10.0
libtpu: 0.0.40
codegen_flags: <defaults>
</compile_context>

<pallas_src>
import jax
import jax.numpy as jnp
from jax.experimental import pallas as pl
from jax.experimental.pallas import tpu as pltpu


# ----------------------------------------------------------------------------
# Tiling: pooled rows per tile (multiple of 8), padded row count, grid size.
# ----------------------------------------------------------------------------
def _select_tiling(mo, cin, cout, x_itemsize, y_itemsize, target_rows):
    try:
        vmem_phys = int(pltpu.get_tpu_info().vmem_capacity_bytes)
    except Exception:
        vmem_phys = 64 * 1024 * 1024               # v7x per-core VMEM (binding case)
    budget = (vmem_phys * 3) // 4                  # ~48 MiB on v7x, ~96 MiB on v5e/v6e

    weight_bytes = 2 * cin * cout * x_itemsize     # resident weight (double-buffered)
    stats_bytes = 2 * 2 * 8 * cout * 4             # two (8, Cout) stat blocks, 2x buffered
    per_row = 4 * cin * x_itemsize + cout * y_itemsize   # 4 parity rows in + 1 pooled row out
    usable = max(0, budget - weight_bytes - stats_bytes)
    cap = usable // (2 * per_row)                  # 2x: Pallas double-buffers every block
    cap = max(8, (cap // 8) * 8)

    rq = max(8, (min(cap, target_rows) // 8) * 8)
    if mo >= 64:                                   # keep >= 8 grid steps when possible
        rq = min(rq, max(8, ((mo // 8) // 8) * 8))

    t = -(-mo // rq)                               # cdiv
    if t > 1 and t % 2:                            # even grid -> balanced v7x megacore split
        t += 1
    return rq, t, t * rq, budget


# ----------------------------------------------------------------------------
# Fused pass: 1x1 conv (bf16 MXU matmul, f32 acc) + ReLU + 2x2 avg-pool
#             + per-tile BN partial sums.
#
#   xs_ref : (4, Rq, Cin)   parity streams (ee, eo, oe, oo), rows ordered (n, ho, wo)
#   w_ref  : (Cin, Cout)    1x1 conv weight (resident across the grid)
#   y_ref  : (Rq, Cout)     pooled, pre-BN-affine output rows, ordered (n, ho, wo)
#   sum_ref: (8, Cout)      per-tile sum(z)   over the UN-pooled z (row-replicated)
#   sq_ref : (8, Cout)      per-tile sum(z*z) over the UN-pooled z (row-replicated)
# ----------------------------------------------------------------------------
def _fused_conv_relu_pool_stats_kernel(xs_ref, w_ref, y_ref, sum_ref, sq_ref):
    w = w_ref[...]
    z0 = jnp.maximum(jnp.dot(xs_ref[0], w, preferred_element_type=jnp.float32), 0.0)
    z1 = jnp.maximum(jnp.dot(xs_ref[1], w, preferred_element_type=jnp.float32), 0.0)
    z2 = jnp.maximum(jnp.dot(xs_ref[2], w, preferred_element_type=jnp.float32), 0.0)
    z3 = jnp.maximum(jnp.dot(xs_ref[3], w, preferred_element_type=jnp.float32), 0.0)

    zsum = (z0 + z1) + (z2 + z3)                       # horizontal+vertical pair sums
    zsq = (z0 * z0 + z1 * z1) + (z2 * z2 + z3 * z3)

    # Fused 2x2 average pool (the BN affine commutes with the pool; applied in XLA).
    y_ref[...] = (zsum * 0.25).astype(y_ref.dtype)

    # BN batch-statistic partial sums over the full-resolution ReLU(conv) activations.
    # One distinct block per grid step -> the grid axis stays "parallel".
    sum_ref[...] = jnp.broadcast_to(jnp.sum(zsum, axis=0, keepdims=True), sum_ref.shape)
    sq_ref[...] = jnp.broadcast_to(jnp.sum(zsq, axis=0, keepdims=True), sq_ref.shape)


def transition_layer_forward(x_nchw, conv_w, gamma, beta, eps=1e-5,
                             matmul_dtype=jnp.bfloat16,
                             intermediate_dtype=jnp.float32,
                             target_rows=2048):
    """x_nchw: (N, Cin, H, W) f32.  conv_w: (Cout, Cin) (1x1 OIHW kernel squeezed)."""
    N, Cin, H, W = x_nchw.shape
    Cout = conv_w.shape[0]
    assert H % 2 == 0 and W % 2 == 0, "AvgPool2d(2,2) needs even spatial dims"
    Ho, Wo = H // 2, W // 2
    M = N * H * W                  # un-pooled pixel count (BN statistics denominator)
    Mo = N * Ho * Wo               # pooled pixel count

    # ---- XLA glue: ONE layout pass -------------------------------------------
    # NCHW -> (hp, wp, n, ho, wo, c) -> (4, Mo, Cin) bf16 parity streams.
    x_phases = jnp.transpose(
        x_nchw.reshape(N, Cin, Ho, 2, Wo, 2), (3, 5, 0, 2, 4, 1)
    ).reshape(4, Mo, Cin).astype(matmul_dtype)
    w_mat = conv_w.reshape(Cout, Cin).T.astype(matmul_dtype)            # (Cin, Cout)

    # ---- tiling (double-buffer-aware, chip-derived VMEM budget) ---------------
    x_isz = jnp.dtype(matmul_dtype).itemsize
    y_isz = jnp.dtype(intermediate_dtype).itemsize
    Rq, T, Mo_pad, vmem_budget = _select_tiling(Mo, Cin, Cout, x_isz, y_isz, target_rows)
    if Mo_pad > Mo:
        # Zero rows contribute 0 to the BN partial sums (ReLU(0 @ W) == 0) -> safe.
        x_phases = jnp.pad(x_phases, ((0, 0), (0, Mo_pad - Mo), (0, 0)))

    # ---- single fused pallas pass ---------------------------------------------
    # TODO(synk): intermediate_dtype=jnp.bfloat16 would halve the pooled-map HBM
    # writeback; kept f32 so the f32 validation path holds 1e-4 accuracy.
    y_pool, sums, sqs = pl.pallas_call(
        _fused_conv_relu_pool_stats_kernel,
        out_shape=(
            jax.ShapeDtypeStruct((Mo_pad, Cout), intermediate_dtype),
            jax.ShapeDtypeStruct((T * 8, Cout), jnp.float32),
            jax.ShapeDtypeStruct((T * 8, Cout), jnp.float32),
        ),
        grid_spec=pltpu.PrefetchScalarGridSpec(
            num_scalar_prefetch=0,
            grid=(T,),
            in_specs=[
                pl.BlockSpec((4, Rq, Cin), lambda i: (0, i, 0)),
                pl.BlockSpec((Cin, Cout), lambda i: (0, 0)),
            ],
            out_specs=[
                pl.BlockSpec((Rq, Cout), lambda i: (i, 0)),
                pl.BlockSpec((8, Cout), lambda i: (i, 0)),
                pl.BlockSpec((8, Cout), lambda i: (i, 0)),
            ],
        ),
        compiler_params=pltpu.CompilerParams(
            dimension_semantics=("parallel",),
            vmem_limit_bytes=int(vmem_budget),
        ),
    )(x_phases, w_mat)

    # ---- XLA glue: tiny stat reduction -> BN scale/shift (training-mode stats) --
    tot_sum = jnp.sum(sums.reshape(T, 8, Cout)[:, 0, :], axis=0)
    tot_sq = jnp.sum(sqs.reshape(T, 8, Cout)[:, 0, :], axis=0)
    mean = tot_sum / M
    var = tot_sq / M - mean * mean                   # biased variance (training mode)
    scale = gamma.astype(jnp.float32) * jax.lax.rsqrt(var + eps)
    shift = beta.astype(jnp.float32) - mean * scale

    # ---- BN affine in plain JAX: XLA fuses it into the NHWC->NCHW transpose -----
    out = y_pool[:Mo].astype(jnp.float32) * scale[None, :] + shift[None, :]
    return out.reshape(N, Ho, Wo, Cout).transpose(0, 3, 1, 2)


# ----------------------------------------------------------------------------
# Pure-JAX reference (mirrors the PyTorch module in training mode)
# ----------------------------------------------------------------------------
def reference_forward(x_nchw, conv_w, gamma, beta, eps=1e-5):
    z = jnp.einsum("nchw,oc->nohw", x_nchw, conv_w)        # 1x1 conv, no bias
    z = jnp.maximum(z, 0.0)                                # ReLU
    mean = jnp.mean(z, axis=(0, 2, 3), keepdims=True)      # batch stats (training)
    var = jnp.mean((z - mean) ** 2, axis=(0, 2, 3), keepdims=True)
    z = (z - mean) * jax.lax.rsqrt(var + eps)
    z = z * gamma[None, :, None, None] + beta[None, :, None, None]
    N, C, H, W = z.shape
    z = z.reshape(N, C, H // 2, 2, W // 2, 2)
    return z.mean(axis=(3, 5))                             # AvgPool2d(2, 2)


if __name__ == "__main__":
    key = jax.random.PRNGKey(0)
    k_x, k_w, k_g, k_b = jax.random.split(key, 4)

    N, Cin, H, W = 2, 4, 16, 16
    Cout = 8

    x = jax.random.normal(k_x, (N, Cin, H, W), dtype=jnp.float32)
    conv_w = jax.random.normal(k_w, (Cout, Cin), dtype=jnp.float32) * 0.5   # Conv2d 1x1, bias=False
    gamma = 1.0 + 0.1 * jax.random.normal(k_g, (Cout,), dtype=jnp.float32)  # BN weight
    beta = 0.1 * jax.random.normal(k_b, (Cout,), dtype=jnp.float32)         # BN bias

    ref = reference_forward(x, conv_w, gamma, beta)

    # (a) f32-operand path: validates the fused kernel math tightly vs the reference.
    out_f32 = jax.block_until_ready(
        transition_layer_forward(x, conv_w, gamma, beta, matmul_dtype=jnp.float32))
    assert out_f32.shape == (N, Cout, H // 2, W // 2), out_f32.shape
    err_f32 = float(jnp.max(jnp.abs(out_f32 - ref)))
    assert jnp.allclose(out_f32, ref, atol=1e-4, rtol=1e-4), err_f32

    # (b) default bf16 MXU path (the fast one): operand rounding -> bf16-level tolerance.
    out_bf16 = jax.block_until_ready(transition_layer_forward(x, conv_w, gamma, beta))
    assert out_bf16.shape == (N, Cout, H // 2, W // 2), out_bf16.shape
    err_bf16 = float(jnp.max(jnp.abs(out_bf16 - ref)))
    assert jnp.allclose(out_bf16, ref, atol=3e-2, rtol=3e-2), err_bf16

    print("KERNEL_OK")
</pallas_src>

<mosaic_0001>
module attributes {stable_mosaic.version = 11 : i64} {
  func.func @_fused_conv_relu_pool_stats_kernel(%arg0: i32, %arg1: memref<4x16x4xf32, #tpu.memory_space<vmem>>, %arg2: memref<4x8xf32, #tpu.memory_space<vmem>>, %arg3: memref<16x8xf32, #tpu.memory_space<vmem>>, %arg4: memref<8x8xf32, #tpu.memory_space<vmem>>, %arg5: memref<8x8xf32, #tpu.memory_space<vmem>>) attributes {dimension_semantics = [#tpu.dimension_semantics<parallel>], iteration_bounds = array<i64: 8>, scalar_prefetch = 0 : i64, scratch_operands = 0 : i64, tpu.core_type = #tpu.core_type<tc>, window_params = [{transform_indices = @transform_0, window_bounds = array<i64: 4, 16, 4>}, {pipeline_mode = #tpu.pipeline_mode<synchronous>, transform_indices = @transform_1, window_bounds = array<i64: 4, 8>}, {transform_indices = @transform_2, window_bounds = array<i64: 16, 8>}, {transform_indices = @transform_3, window_bounds = array<i64: 8, 8>}, {transform_indices = @transform_4, window_bounds = array<i64: 8, 8>}]} {
    %c0 = arith.constant 0 : index
    %c0_0 = arith.constant 0 : index
    %0 = vector.load %arg2[%c0, %c0_0] : memref<4x8xf32, #tpu.memory_space<vmem>>, vector<4x8xf32>
    %c0_1 = arith.constant 0 : index
    %c0_2 = arith.constant 0 : index
    %c0_3 = arith.constant 0 : index
    %1 = vector.load %arg1[%c0_1, %c0_2, %c0_3] : memref<4x16x4xf32, #tpu.memory_space<vmem>>, vector<1x16x4xf32>
    %2 = vector.shape_cast %1 : vector<1x16x4xf32> to vector<16x4xf32>
    %cst = arith.constant dense<0.000000e+00> : vector<16x8xf32>
    %3 = tpu.matmul %2, %0, %cst {dimension_numbers = #tpu.dot_dimension_numbers<[1], [0], [0], [1], [0, 0, 1, 1], [], []>} : vector<16x4xf32>, vector<4x8xf32>, vector<16x8xf32> -> vector<16x8xf32>
    %cst_4 = arith.constant 0.000000e+00 : f32
    %4 = vector.broadcast %cst_4 : f32 to vector<16x8xf32>
    %5 = arith.maximumf %3, %4 : vector<16x8xf32>
    %c1 = arith.constant 1 : index
    %c0_5 = arith.constant 0 : index
    %c0_6 = arith.constant 0 : index
    %6 = vector.load %arg1[%c1, %c0_5, %c0_6] : memref<4x16x4xf32, #tpu.memory_space<vmem>>, vector<1x16x4xf32>
    %7 = vector.shape_cast %6 : vector<1x16x4xf32> to vector<16x4xf32>
    %cst_7 = arith.constant dense<0.000000e+00> : vector<16x8xf32>
    %8 = tpu.matmul %7, %0, %cst_7 {dimension_numbers = #tpu.dot_dimension_numbers<[1], [0], [0], [1], [0, 0, 1, 1], [], []>} : vector<16x4xf32>, vector<4x8xf32>, vector<16x8xf32> -> vector<16x8xf32>
    %cst_8 = arith.constant 0.000000e+00 : f32
    %9 = vector.broadcast %cst_8 : f32 to vector<16x8xf32>
    %10 = arith.maximumf %8, %9 : vector<16x8xf32>
    %c2 = arith.constant 2 : index
    %c0_9 = arith.constant 0 : index
    %c0_10 = arith.constant 0 : index
    %11 = vector.load %arg1[%c2, %c0_9, %c0_10] : memref<4x16x4xf32, #tpu.memory_space<vmem>>, vector<1x16x4xf32>
    %12 = vector.shape_cast %11 : vector<1x16x4xf32> to vector<16x4xf32>
    %cst_11 = arith.constant dense<0.000000e+00> : vector<16x8xf32>
    %13 = tpu.matmul %12, %0, %cst_11 {dimension_numbers = #tpu.dot_dimension_numbers<[1], [0], [0], [1], [0, 0, 1, 1], [], []>} : vector<16x4xf32>, vector<4x8xf32>, vector<16x8xf32> -> vector<16x8xf32>
    %cst_12 = arith.constant 0.000000e+00 : f32
    %14 = vector.broadcast %cst_12 : f32 to vector<16x8xf32>
    %15 = arith.maximumf %13, %14 : vector<16x8xf32>
    %c3 = arith.constant 3 : index
    %c0_13 = arith.constant 0 : index
    %c0_14 = arith.constant 0 : index
    %16 = vector.load %arg1[%c3, %c0_13, %c0_14] : memref<4x16x4xf32, #tpu.memory_space<vmem>>, vector<1x16x4xf32>
    %17 = vector.shape_cast %16 : vector<1x16x4xf32> to vector<16x4xf32>
    %cst_15 = arith.constant dense<0.000000e+00> : vector<16x8xf32>
    %18 = tpu.matmul %17, %0, %cst_15 {dimension_numbers = #tpu.dot_dimension_numbers<[1], [0], [0], [1], [0, 0, 1, 1], [], []>} : vector<16x4xf32>, vector<4x8xf32>, vector<16x8xf32> -> vector<16x8xf32>
    %cst_16 = arith.constant 0.000000e+00 : f32
    %19 = vector.broadcast %cst_16 : f32 to vector<16x8xf32>
    %20 = arith.maximumf %18, %19 : vector<16x8xf32>
    %21 = arith.addf %5, %10 : vector<16x8xf32>
    %22 = arith.addf %15, %20 : vector<16x8xf32>
    %23 = arith.addf %21, %22 : vector<16x8xf32>
    %24 = arith.mulf %5, %5 : vector<16x8xf32>
    %25 = arith.mulf %10, %10 : vector<16x8xf32>
    %26 = arith.addf %24, %25 : vector<16x8xf32>
    %27 = arith.mulf %15, %15 : vector<16x8xf32>
    %28 = arith.mulf %20, %20 : vector<16x8xf32>
    %29 = arith.addf %27, %28 : vector<16x8xf32>
    %30 = arith.addf %26, %29 : vector<16x8xf32>
    %cst_17 = arith.constant 2.500000e-01 : f32
    %31 = vector.broadcast %cst_17 : f32 to vector<16x8xf32>
    %32 = arith.mulf %23, %31 : vector<16x8xf32>
    %c0_18 = arith.constant 0 : index
    %c0_19 = arith.constant 0 : index
    %33 = vector.load %arg3[%c0_18, %c0_19] : memref<16x8xf32, #tpu.memory_space<vmem>>, vector<16x8xf32>
    tpu.vector_store %arg3[%c0_18, %c0_19], %32 {strides = array<i32>} : memref<16x8xf32, #tpu.memory_space<vmem>>, vector<16x8xf32>,
    %cst_20 = arith.constant dense<0.000000e+00> : vector<8xf32>
    %34 = vector.multi_reduction <add>, %23, %cst_20 [0] : vector<16x8xf32> to vector<8xf32>
    %35 = vector.shape_cast %34 : vector<8xf32> to vector<1x8xf32>
    %36 = vector.shape_cast %35 : vector<1x8xf32> to vector<1x8xf32>
    %37 = vector.broadcast %36 : vector<1x8xf32> to vector<8x8xf32>
    %c0_21 = arith.constant 0 : index
    %c0_22 = arith.constant 0 : index
    %38 = vector.load %arg4[%c0_21, %c0_22] : memref<8x8xf32, #tpu.memory_space<vmem>>, vector<8x8xf32>
    tpu.vector_store %arg4[%c0_21, %c0_22], %37 {strides = array<i32>} : memref<8x8xf32, #tpu.memory_space<vmem>>, vector<8x8xf32>,
    %cst_23 = arith.constant dense<0.000000e+00> : vector<8xf32>
    %39 = vector.multi_reduction <add>, %30, %cst_23 [0] : vector<16x8xf32> to vector<8xf32>
    %40 = vector.shape_cast %39 : vector<8xf32> to vector<1x8xf32>
    %41 = vector.shape_cast %40 : vector<1x8xf32> to vector<1x8xf32>
    %42 = vector.broadcast %41 : vector<1x8xf32> to vector<8x8xf32>
    %c0_24 = arith.constant 0 : index
    %c0_25 = arith.constant 0 : index
    %43 = vector.load %arg5[%c0_24, %c0_25] : memref<8x8xf32, #tpu.memory_space<vmem>>, vector<8x8xf32>
    tpu.vector_store %arg5[%c0_24, %c0_25], %42 {strides = array<i32>} : memref<8x8xf32, #tpu.memory_space<vmem>>, vector<8x8xf32>,
    return
  }
  func.func @transform_0(%arg0: i32) -> (i32, i32, i32) {
    %c0_i32 = arith.constant 0 : i32
    %c0_i32_0 = arith.constant 0 : i32
    %c0_i32_1 = arith.constant 0 : i32
    return %c0_i32, %arg0, %c0_i32_0 : i32, i32, i32
  }
  func.func @transform_1(%arg0: i32) -> (i32, i32) {
    %c0_i32 = arith.constant 0 : i32
    %c0_i32_0 = arith.constant 0 : i32
    %c0_i32_1 = arith.constant 0 : i32
    return %c0_i32, %c0_i32_0 : i32, i32
  }
  func.func @transform_2(%arg0: i32) -> (i32, i32) {
    %c0_i32 = arith.constant 0 : i32
    %c0_i32_0 = arith.constant 0 : i32
    return %arg0, %c0_i32 : i32, i32
  }
  func.func @transform_3(%arg0: i32) -> (i32, i32) {
    %c0_i32 = arith.constant 0 : i32
    %c0_i32_0 = arith.constant 0 : i32
    return %arg0, %c0_i32 : i32, i32
  }
  func.func @transform_4(%arg0: i32) -> (i32, i32) {
    %c0_i32 = arith.constant 0 : i32
    %c0_i32_0 = arith.constant 0 : i32
    return %arg0, %c0_i32 : i32, i32
  }
}

</mosaic_0001>

<llo_original>
// kernel: tpu_custom_call.1
$region0: #{tpu_custom_call.1}
  #allocation0 [shape = 'u32[]', space=smem, size = 0x4, offset = 0x4, fixed_abs, tag = 'smem constant byte address 0x4 - core index']
  #allocation1 [shape = 'u32[72,128]{1,0:T(1,128)}', space=vmem, size = 0x9000, scoped, tag = 'internal scratch']
  %s0 = inlined_call_operand.vmem [shape: f32[4,128,4], index: 0, kind: input, shape index: {}]
  %s1 = inlined_call_operand.vmem [shape: f32[4,8], index: 1, kind: input, shape index: {}]
  %s2 = inlined_call_operand.vmem [shape: f32[128,8], index: 2, kind: output, shape index: {0}]
  %s3 = inlined_call_operand.vmem [shape: f32[64,8], index: 3, kind: output, shape index: {1}]
  %s4 = inlined_call_operand.vmem [shape: f32[64,8], index: 4, kind: output, shape index: {2}]
  %5 = xla_tuple %s2, %s3, %s4
  %s6 = sld [smem:[#allocation0]]
  $region95: #{tpu_custom_call.1} parent=0
    _
  %s8 = ssub.s32 1, %s6
  %s9 = scalar_select 0, %s8, %s6
  $region1: #{tpu_custom_call.1} parent=0
    #allocation2 [shape = 'u8[65536]{0}', space=vmem, size = 0x10000, scoped, tag = 'input window, operand 0']
    loop: start=0, step=1, limit=10
    $region2: #{tpu_custom_call.1} parent=1 // loop_pre_header
      _
    $region3: #{tpu_custom_call.1} parent=1 // loop_header
      %s11 = sphi 0, %s15
      %p12 = scmp.ge.s32.totalorder %s11, 10
      %s21 = sphi 0, %s23
      %s24 = sphi 0, %s21
      %s25 = sphi 0, %s24
      %s41 = sphi 0, %s25
      %s45 = sphi 0, %s45
      %s47 = sphi 0, %s45
      %s48 = sphi 0, %s47
      %s62 = sphi 0, %s48
      %s68 = sphi 0, %s70
      %s71 = sphi 0, %s68
      %s72 = sphi 0, %s71
      %s88 = sphi 0, %s72
      %s94 = sphi 0, %s96
      %s97 = sphi 0, %s94
      %s98 = sphi 0, %s97
      %s114 = sphi 0, %s98
      %s120 = sphi 0, %s122
      %s123 = sphi 0, %s120
      %s124 = sphi 0, %s123
      %s140 = sphi 0, %s124
    $region4: #{tpu_custom_call.1} parent=1 // loop_header_branch
      %14 = sbr.rel (%p12) target = $region8
    $region5: #{tpu_custom_call.1} parent=1 // loop_body
      %s16 = ssub.s32 %s11, 1
      %s17 = ssub.s32 %s11, 2
      %s18 = sadd.s32 %s11, 1
      %s19 = ssub.s32 %s11, %s18
      %p20 = scmp.eq.s32.totalorder %s19, 0
      %s22 = sadd.s32 %s21, 1
      %s23 = scalar_select %p20, %s21, %s22
      %p26 = pneg %p20
      %p27 = scmp.eq.s32.totalorder %s11, 7
      %p28 = por %p26, %p27
      %p29 = scmp.ne.s32.totalorder %s21, %s24
      %p30 = scmp.eq.s32.totalorder %s11, 0
      %p31 = por %p29, %p30
      %p32 = scmp.ne.s32.totalorder %s21, %s24
      %p33 = scmp.eq.s32.totalorder %s16, 7
      %p34 = por %p32, %p33
      %p35 = scmp.ne.s32.totalorder %s24, %s25
      %p36 = scmp.eq.s32.totalorder %s16, 0
      %p37 = por %p35, %p36
      %p38 = scmp.ne.s32.totalorder %s24, %s25
      %p39 = scmp.eq.s32.totalorder %s17, 7
      %p40 = por %p38, %p39
      %p42 = scmp.ne.s32.totalorder %s25, %s41
      %p43 = scmp.eq.s32.totalorder %s17, 0
      %p44 = por %p42, %p43
      %s46 = sadd.s32 %s45, 1
      %p49 = scmp.eq.s32.totalorder %s11, 7
      %p50 = scmp.ne.s32.totalorder %s45, %s47
      %p51 = scmp.eq.s32.totalorder %s11, 0
      %p52 = por %p50, %p51
      %p53 = scmp.ne.s32.totalorder %s45, %s47
      %p54 = scmp.eq.s32.totalorder %s16, 7
      %p55 = por %p53, %p54
      %p56 = scmp.ne.s32.totalorder %s47, %s48
      %p57 = scmp.eq.s32.totalorder %s16, 0
      %p58 = por %p56, %p57
      %p59 = scmp.ne.s32.totalorder %s47, %s48
      %p60 = scmp.eq.s32.totalorder %s17, 7
      %p61 = por %p59, %p60
      %p63 = scmp.ne.s32.totalorder %s48, %s62
      %p64 = scmp.eq.s32.totalorder %s17, 0
      %p65 = por %p63, %p64
      %s66 = ssub.s32 %s11, %s18
      %p67 = scmp.eq.s32.totalorder %s66, 0
      %s69 = sadd.s32 %s68, 1
      %s70 = scalar_select %p67, %s68, %s69
      %p73 = pneg %p67
      %p74 = scmp.eq.s32.totalorder %s11, 7
      %p75 = por %p73, %p74
      %p76 = scmp.ne.s32.totalorder %s68, %s71
      %p77 = scmp.eq.s32.totalorder %s11, 0
      %p78 = por %p76, %p77
      %p79 = scmp.ne.s32.totalorder %s68, %s71
      %p80 = scmp.eq.s32.totalorder %s16, 7
      %p81 = por %p79, %p80
      %p82 = scmp.ne.s32.totalorder %s71, %s72
      %p83 = scmp.eq.s32.totalorder %s16, 0
      %p84 = por %p82, %p83
      %p85 = scmp.ne.s32.totalorder %s71, %s72
      %p86 = scmp.eq.s32.totalorder %s17, 7
      %p87 = por %p85, %p86
      %p89 = scmp.ne.s32.totalorder %s72, %s88
      %p90 = scmp.eq.s32.totalorder %s17, 0
      %p91 = por %p89, %p90
      %s92 = ssub.s32 %s11, %s18
      %p93 = scmp.eq.s32.totalorder %s92, 0
      %s95 = sadd.s32 %s94, 1
      %s96 = scalar_select %p93, %s94, %s95
      %p99 = pneg %p93
      %p100 = scmp.eq.s32.totalorder %s11, 7
      %p101 = por %p99, %p100
      %p102 = scmp.ne.s32.totalorder %s94, %s97
      %p103 = scmp.eq.s32.totalorder %s11, 0
      %p104 = por %p102, %p103
      %p105 = scmp.ne.s32.totalorder %s94, %s97
      %p106 = scmp.eq.s32.totalorder %s16, 7
      %p107 = por %p105, %p106
      %p108 = scmp.ne.s32.totalorder %s97, %s98
      %p109 = scmp.eq.s32.totalorder %s16, 0
      %p110 = por %p108, %p109
      %p111 = scmp.ne.s32.totalorder %s97, %s98
      %p112 = scmp.eq.s32.totalorder %s17, 7
      %p113 = por %p111, %p112
      %p115 = scmp.ne.s32.totalorder %s98, %s114
      %p116 = scmp.eq.s32.totalorder %s17, 0
      %p117 = por %p115, %p116
      %s118 = ssub.s32 %s11, %s18
      %p119 = scmp.eq.s32.totalorder %s118, 0
      %s121 = sadd.s32 %s120, 1
      %s122 = scalar_select %p119, %s120, %s121
      %p125 = pneg %p119
      %p126 = scmp.eq.s32.totalorder %s11, 7
      %p127 = por %p125, %p126
      %p128 = scmp.ne.s32.totalorder %s120, %s123
      %p129 = scmp.eq.s32.totalorder %s11, 0
      %p130 = por %p128, %p129
      %p131 = scmp.ne.s32.totalorder %s120, %s123
      %p132 = scmp.eq.s32.totalorder %s16, 7
      %p133 = por %p131, %p132
      %p134 = scmp.ne.s32.totalorder %s123, %s124
      %p135 = scmp.eq.s32.totalorder %s16, 0
      %p136 = por %p134, %p135
      %p137 = scmp.ne.s32.totalorder %s123, %s124
      %p138 = scmp.eq.s32.totalorder %s17, 7
      %p139 = por %p137, %p138
      %p141 = scmp.ne.s32.totalorder %s124, %s140
      %p142 = scmp.eq.s32.totalorder %s17, 0
      %p143 = por %p141, %p142
      %p144 = scmp.le.s32.totalorder 1, %s11
      %p145 = scmp.lt.s32.totalorder %s11, 9
      %p146 = pnand %p144, %p145
      %p147 = pneg %p146
      // Predicated region
      $region9: #{tpu_custom_call.1} parent=5 // pred_check
        _
      $region10: #{tpu_custom_call.1} parent=5 // pred_check_branch
        %149 = sbr.rel (%p146) target = $region12
      $region11: #{tpu_custom_call.1} parent=5 // pred_region
        %s150 = ssub.s32 %s11, 1
        // Predicated region
        $region13: #{tpu_custom_call.1} parent=11 // pred_check
          %p151 = pneg %p58
        $region14: #{tpu_custom_call.1} parent=11 // pred_check_branch
          %153 = sbr.rel (%p151) target = $region16
        $region15: #{tpu_custom_call.1} parent=11 // pred_region
          _
        $region16: #{tpu_custom_call.1} parent=11 // pred_fallthru
          _
      $region12: #{tpu_custom_call.1} parent=5 // pred_fallthru
        _
      %p154 = scmp.lt.s32.totalorder %s11, 8
      // Predicated region
      $region17: #{tpu_custom_call.1} parent=5 // pred_check
        %p155 = pneg %p154
      $region18: #{tpu_custom_call.1} parent=5 // pred_check_branch
        %157 = sbr.rel (%p155) target = $region20
      $region19: #{tpu_custom_call.1} parent=5 // pred_region
        // Predicated region
        $region21: #{tpu_custom_call.1} parent=19 // pred_check
          %p158 = pneg %p31
        $region22: #{tpu_custom_call.1} parent=19 // pred_check_branch
          %160 = sbr.rel (%p158) target = $region24
        $region23: #{tpu_custom_call.1} parent=19 // pred_region
          %s161 = sand.u32 %s21, 1
          %s162 = sand.u32 %s21, 1
          %s163 = smul.addr %s162, 64
          %s164 = scalar_lea.vmem [#allocation2], %s163
          %s165 = smul.u32 2, %s11
          %s166 = smul.addr %s165, 8
          %s167 = scalar_lea.vmem %s0, %s166
          // Predicated region
          $region25: #{tpu_custom_call.1} parent=23 // pred_check
            _
          $region26: #{tpu_custom_call.1} parent=23 // pred_check_branch
            %169 = sbr.rel (0) target = $region28
          $region27: #{tpu_custom_call.1} parent=23 // pred_region
            // Predicated region
            $region29: #{tpu_custom_call.1} parent=27 // pred_check
              _
            $region30: #{tpu_custom_call.1} parent=27 // pred_check_branch
              %171 = sbr.rel (0) target = $region32
            $region31: #{tpu_custom_call.1} parent=27 // pred_region
              // Predicated region
              $region44: #{tpu_custom_call.1} parent=31 // pred_check
                _
              $region45: #{tpu_custom_call.1} parent=31 // pred_check_branch
                %201 = sbr.rel (0) target = $region47
              $region46: #{tpu_custom_call.1} parent=31 // pred_region
                loop: start=0, step=1, limit=1
                $region48: #{tpu_custom_call.1} parent=46 // loop_pre_header
                  _
                $region49: #{tpu_custom_call.1} parent=46 // loop_header
                  %s203 = sphi 0, %s207
                  %p204 = scmp.ge.s32.totalorder %s203, 1
                  %s208 = sphi %s167, %s167
                  %s209 = sphi %s164, %s164
                $region50: #{tpu_custom_call.1} parent=46 // loop_header_branch
                  %206 = sbr.rel (%p204) target = $region54
                $region51: #{tpu_custom_call.1} parent=46 // loop_body
                  %v210 = vld [vmem:[%s208] sm:$0xff]
                  %211 = vst [vmem:[%s209] sm:$0xff] %v210
                  %v212 = vld [vmem:[%s208 + $0x8] sm:$0xff]
                  %213 = vst [vmem:[%s209 + $0x8] sm:$0xff] %v212
                  %v214 = vld [vmem:[%s208 + $0x80] sm:$0xff]
                  %215 = vst [vmem:[%s209 + $0x10] sm:$0xff] %v214
                  %v216 = vld [vmem:[%s208 + $0x88] sm:$0xff]
                  %217 = vst [vmem:[%s209 + $0x18] sm:$0xff] %v216
                  %v218 = vld [vmem:[%s208 + $0x100] sm:$0xff]
                  %219 = vst [vmem:[%s209 + $0x20] sm:$0xff] %v218
                  %v220 = vld [vmem:[%s208 + $0x108] sm:$0xff]
                  %221 = vst [vmem:[%s209 + $0x28] sm:$0xff] %v220
                  %v222 = vld [vmem:[%s208 + $0x180] sm:$0xff]
                  %223 = vst [vmem:[%s209 + $0x30] sm:$0xff] %v222
                  %v224 = vld [vmem:[%s208 + $0x188] sm:$0xff]
                  %225 = vst [vmem:[%s209 + $0x38] sm:$0xff] %v224
                $region52: #{tpu_custom_call.1} parent=46 // loop_footer
                  %s207 = sadd.s32 1, %s203
                $region53: #{tpu_custom_call.1} parent=46 // loop_footer_branch
                  %202 = sbr.rel target = $region49
                $region54: #{tpu_custom_call.1} parent=46 // loop_exit
                  _
              $region47: #{tpu_custom_call.1} parent=31 // pred_fallthru
                _
              // Predicated region
              $region55: #{tpu_custom_call.1} parent=31 // pred_check
                _
              $region56: #{tpu_custom_call.1} parent=31 // pred_check_branch
                %227 = sbr.rel target = $region58
              $region57: #{tpu_custom_call.1} parent=31 // pred_region
                _
              $region58: #{tpu_custom_call.1} parent=31 // pred_fallthru
                _
            $region32: #{tpu_custom_call.1} parent=27 // pred_fallthru
              _
            // Predicated region
            $region33: #{tpu_custom_call.1} parent=27 // pred_check
              _
            $region34: #{tpu_custom_call.1} parent=27 // pred_check_branch
              %173 = sbr.rel target = $region36
            $region35: #{tpu_custom_call.1} parent=27 // pred_region
              %s175 = ssub.s32 256, 1
              loop: start=0, step=1, limit=1
              $region37: #{tpu_custom_call.1} parent=35 // loop_pre_header
                _
              $region38: #{tpu_custom_call.1} parent=35 // loop_header
                %s177 = sphi 0, %s181
                %p178 = scmp.ge.s32.totalorder %s177, 1
                %s182 = sphi %s167, %s167
                %s183 = sphi %s164, %s164
              $region39: #{tpu_custom_call.1} parent=35 // loop_header_branch
                %180 = sbr.rel (%p178) target = $region43
              $region40: #{tpu_custom_call.1} parent=35 // loop_body
                %v184 = vld [vmem:[%s182] sm:%s175]
                %185 = vst [vmem:[%s183] sm:%s175] %v184
                %v186 = vld [vmem:[%s182 + $0x8] sm:%s175]
                %187 = vst [vmem:[%s183 + $0x8] sm:%s175] %v186
                %v188 = vld [vmem:[%s182 + $0x80] sm:%s175]
                %189 = vst [vmem:[%s183 + $0x10] sm:%s175] %v188
                %v190 = vld [vmem:[%s182 + $0x88] sm:%s175]
                %191 = vst [vmem:[%s183 + $0x18] sm:%s175] %v190
                %v192 = vld [vmem:[%s182 + $0x100] sm:%s175]
                %193 = vst [vmem:[%s183 + $0x20] sm:%s175] %v192
                %v194 = vld [vmem:[%s182 + $0x108] sm:%s175]
                %195 = vst [vmem:[%s183 + $0x28] sm:%s175] %v194
                %v196 = vld [vmem:[%s182 + $0x180] sm:%s175]
                %197 = vst [vmem:[%s183 + $0x30] sm:%s175] %v196
                %v198 = vld [vmem:[%s182 + $0x188] sm:%s175]
                %199 = vst [vmem:[%s183 + $0x38] sm:%s175] %v198
              $region41: #{tpu_custom_call.1} parent=35 // loop_footer
                %s181 = sadd.s32 1, %s177
              $region42: #{tpu_custom_call.1} parent=35 // loop_footer_branch
                %176 = sbr.rel target = $region38
              $region43: #{tpu_custom_call.1} parent=35 // loop_exit
                _
            $region36: #{tpu_custom_call.1} parent=27 // pred_fallthru
              _
          $region28: #{tpu_custom_call.1} parent=23 // pred_fallthru
            _
          %228 = vnop
        $region24: #{tpu_custom_call.1} parent=19 // pred_fallthru
          _
      $region20: #{tpu_custom_call.1} parent=5 // pred_fallthru
        _
      %p229 = scmp.le.s32.totalorder 1, %s11
      %p230 = scmp.lt.s32.totalorder %s11, 9
      %p231 = pnand %p229, %p230
      %p232 = pneg %p231
      // Predicated region
      $region59: #{tpu_custom_call.1} parent=5 // pred_check
        _
      $region60: #{tpu_custom_call.1} parent=5 // pred_check_branch
        %234 = sbr.rel (%p231) target = $region62
      $region61: #{tpu_custom_call.1} parent=5 // pred_region
        %s235 = ssub.s32 %s11, 1
        %s236 = sand.u32 %s24, 1
        %s237 = sand.u32 %s24, 1
        %s238 = smul.addr %s237, 64
        %s239 = scalar_lea.vmem [#allocation2], %s238
        // Predicated region
        $region63: #{tpu_custom_call.1} parent=61 // pred_check
          %p240 = pneg %p37
        $region64: #{tpu_custom_call.1} parent=61 // pred_check_branch
          %242 = sbr.rel (%p240) target = $region66
        $region65: #{tpu_custom_call.1} parent=61 // pred_region
          _
        $region66: #{tpu_custom_call.1} parent=61 // pred_fallthru
          _
        %s243 = sand.u32 %s24, 1
        %s244 = sand.u32 %s24, 1
        %s245 = smul.addr %s244, 64
        %s246 = scalar_lea.vmem [#allocation2], %s245
        %p247 = pneg %p37
        %p248 = pneg %p34
        %p249 = pneg %p58
        %p250 = pneg %p55
        %p251 = pneg %p84
        %p252 = pneg %p81
        %s253 = smul.u32 2, %s16
        %p254 = scmp.lt.s32.totalorder %s253, 15
        %s255 = scalar_select %p254, %s253, 15
        %s256 = smul.addr %s255, 8
        %s257 = scalar_lea.vmem %s2, %s256
        %p258 = pneg %p110
        %p259 = pneg %p107
        %p260 = scmp.lt.s32.totalorder %s16, 7
        %s261 = scalar_select %p260, %s16, 7
        %s262 = smul.addr %s261, 8
        %s263 = scalar_lea.vmem %s3, %s262
        %p264 = pneg %p136
        %p265 = pneg %p133
        %p266 = scmp.lt.s32.totalorder %s16, 7
        %s267 = scalar_select %p266, %s16, 7
        %s268 = smul.addr %s267, 8
        %s269 = scalar_lea.vmem %s4, %s268
        %s270 = smul.u32 2, %s16
        %s271 = smul.u32 2, %s16
        %p272 = scmp.lt.s32.totalorder %s271, 15
        %s273 = scalar_select %p272, %s271, 15
        %s274 = smul.addr %s273, 8
        %s275 = scalar_lea.vmem %s2, %s274
        %s276 = smul.u32 2, %s16
        %p277 = scmp.lt.s32.totalorder %s16, 7
        %s278 = scalar_select %p277, %s16, 7
        %s279 = smul.addr %s278, 8
        %s280 = scalar_lea.vmem %s3, %s279
        %p281 = scmp.lt.s32.totalorder %s16, 7
        %s282 = scalar_select %p281, %s16, 7
        %s283 = smul.addr %s282, 8
        %s284 = scalar_lea.vmem %s4, %s283
        %v285 = vld [vmem:[%s1] sm:$0xf]
        %v286 = vld [vmem:[%s239] sm:$0xff]
        %v287 = vld [vmem:[%s239 + $0x8] sm:$0xff]
        %vm288 = vcmask 31744
        %v290 = vsel %vm288, %v286, 0
        %v293 = vsel %vm288, %v287, 0
        %vm295 = vcmask 1043456
        %v297 = vsel %vm295, %v285, 0
        %299 = vmatpush.msra.mxu0 0.0
        %300 = vmatpush.msra.mxu0 0.0
        %301 = vmatpush.msra.mxu0 0.0
        %302 = vmatpush.msra.mxu0 0.0
        %303 = vmatpush.msra.mxu0 0.0
        %304 = vmatpush.msra.mxu0 0.0
        %305 = vmatpush.msra.mxu0 0.0
        %306 = vmatpush.msra.mxu0 0.0
        %307 = vmatpush.msra.mxu0 0.0
        %308 = vmatpush.msra.mxu0 0.0
        %309 = vmatpush.msra.mxu0 0.0
        %310 = vmatpush.msra.mxu0 0.0
        %311 = vmatpush.msra.mxu0 0.0
        %312 = vmatpush.msra.mxu0 0.0
        %313 = vmatpush.msra.mxu0 0.0
        %314 = vmatpush.msra.mxu0 %v297
        %315 = vmatmul.f32.gmra.mxu0 %v290
        %v316 = vpop.f32.mrf.mxu0
        %v317 = vadd.f32 0.0, %v316
        %318 = vmatmul.f32.gmra.mxu0 %v293
        %v319 = vpop.f32.mrf.mxu0
        %v320 = vadd.f32 0.0, %v319
        %321 = vdwg.mxu0
        %v322 = vmax.f32 %v317, 0.0
        %v323 = vmax.f32 %v320, 0.0
        %s324 = scalar_lea.vmem %s239, 16 [#allocation2]
        %v325 = vld [vmem:[%s324] sm:$0xff]
        %v326 = vld [vmem:[%s324 + $0x8] sm:$0xff]
        %v328 = vsel %vm288, %v325, 0
        %v331 = vsel %vm288, %v326, 0
        %333 = vmatpush.msra.mxu0 0.0
        %334 = vmatpush.msra.mxu0 0.0
        %335 = vmatpush.msra.mxu0 0.0
        %336 = vmatpush.msra.mxu0 0.0
        %337 = vmatpush.msra.mxu0 0.0
        %338 = vmatpush.msra.mxu0 0.0
        %339 = vmatpush.msra.mxu0 0.0
        %340 = vmatpush.msra.mxu0 0.0
        %341 = vmatpush.msra.mxu0 0.0
        %342 = vmatpush.msra.mxu0 0.0
        %343 = vmatpush.msra.mxu0 0.0
        %344 = vmatpush.msra.mxu0 0.0
        %345 = vmatpush.msra.mxu0 0.0
        %346 = vmatpush.msra.mxu0 0.0
        %347 = vmatpush.msra.mxu0 0.0
        %348 = vmatpush.msra.mxu0 %v297
        %349 = vmatmul.f32.gmra.mxu0 %v328
        %v350 = vpop.f32.mrf.mxu0
        %v351 = vadd.f32 0.0, %v350
        %352 = vmatmul.f32.gmra.mxu0 %v331
        %v353 = vpop.f32.mrf.mxu0
        %v354 = vadd.f32 0.0, %v353
        %355 = vdwg.mxu0
        %v356 = vmax.f32 %v351, 0.0
        %v357 = vmax.f32 %v354, 0.0
        %s358 = scalar_lea.vmem %s239, 32 [#allocation2]
        %v359 = vld [vmem:[%s358] sm:$0xff]
        %v360 = vld [vmem:[%s358 + $0x8] sm:$0xff]
        %v362 = vsel %vm288, %v359, 0
        %v365 = vsel %vm288, %v360, 0
        %367 = vmatpush.msra.mxu0 0.0
        %368 = vmatpush.msra.mxu0 0.0
        %369 = vmatpush.msra.mxu0 0.0
        %370 = vmatpush.msra.mxu0 0.0
        %371 = vmatpush.msra.mxu0 0.0
        %372 = vmatpush.msra.mxu0 0.0
        %373 = vmatpush.msra.mxu0 0.0
        %374 = vmatpush.msra.mxu0 0.0
        %375 = vmatpush.msra.mxu0 0.0
        %376 = vmatpush.msra.mxu0 0.0
        %377 = vmatpush.msra.mxu0 0.0
        %378 = vmatpush.msra.mxu0 0.0
        %379 = vmatpush.msra.mxu0 0.0
        %380 = vmatpush.msra.mxu0 0.0
        %381 = vmatpush.msra.mxu0 0.0
        %382 = vmatpush.msra.mxu0 %v297
        %383 = vmatmul.f32.gmra.mxu0 %v362
        %v384 = vpop.f32.mrf.mxu0
        %v385 = vadd.f32 0.0, %v384
        %386 = vmatmul.f32.gmra.mxu0 %v365
        %v387 = vpop.f32.mrf.mxu0
        %v388 = vadd.f32 0.0, %v387
        %389 = vdwg.mxu0
        %v390 = vmax.f32 %v385, 0.0
        %v391 = vmax.f32 %v388, 0.0
        %s392 = scalar_lea.vmem %s239, 48 [#allocation2]
        %v393 = vld [vmem:[%s392] sm:$0xff]
        %v394 = vld [vmem:[%s392 + $0x8] sm:$0xff]
        %v396 = vsel %vm288, %v393, 0
        %v399 = vsel %vm288, %v394, 0
        %401 = vmatpush.msra.mxu0 0.0
        %402 = vmatpush.msra.mxu0 0.0
        %403 = vmatpush.msra.mxu0 0.0
        %404 = vmatpush.msra.mxu0 0.0
        %405 = vmatpush.msra.mxu0 0.0
        %406 = vmatpush.msra.mxu0 0.0
        %407 = vmatpush.msra.mxu0 0.0
        %408 = vmatpush.msra.mxu0 0.0
        %409 = vmatpush.msra.mxu0 0.0
        %410 = vmatpush.msra.mxu0 0.0
        %411 = vmatpush.msra.mxu0 0.0
        %412 = vmatpush.msra.mxu0 0.0
        %413 = vmatpush.msra.mxu0 0.0
        %414 = vmatpush.msra.mxu0 0.0
        %415 = vmatpush.msra.mxu0 0.0
        %416 = vmatpush.msra.mxu0 %v297
        %417 = vmatmul.f32.gmra.mxu0 %v396
        %v418 = vpop.f32.mrf.mxu0
        %v419 = vadd.f32 0.0, %v418
        %420 = vmatmul.f32.gmra.mxu0 %v399
        %v421 = vpop.f32.mrf.mxu0
        %v422 = vadd.f32 0.0, %v421
        %423 = vdwg.mxu0
        %v424 = vmax.f32 %v419, 0.0
        %v425 = vmax.f32 %v422, 0.0
        %v426 = vadd.f32 %v322, %v356
        %v427 = vadd.f32 %v323, %v357
        %v428 = vadd.f32 %v390, %v424
        %v429 = vadd.f32 %v391, %v425
        %v430 = vadd.f32 %v426, %v428
        %v431 = vadd.f32 %v427, %v429
        %v432 = vmul.f32 %v322, %v322
        %v433 = vmul.f32 %v323, %v323
        %v434 = vmul.f32 %v356, %v356
        %v435 = vmul.f32 %v357, %v357
        %v436 = vadd.f32 %v432, %v434
        %v437 = vadd.f32 %v433, %v435
        %v438 = vmul.f32 %v390, %v390
        %v439 = vmul.f32 %v391, %v391
        %v440 = vmul.f32 %v424, %v424
        %v441 = vmul.f32 %v425, %v425
        %v442 = vadd.f32 %v438, %v440
        %v443 = vadd.f32 %v439, %v441
        %v444 = vadd.f32 %v436, %v442
        %v445 = vadd.f32 %v437, %v443
        %v446 = vmul.f32 %v430, 0.25
        %v447 = vmul.f32 %v431, 0.25
        %vm448 = vcmask 64512
        %449 = vst.msk [vmem:[%s275] sm:$0xff] %vm448, %v446
        %450 = vst.msk [vmem:[%s275 + $0x8] sm:$0xff] %vm448, %v447
        %v451 = vsel %vm448, %v430, 0.0
        %v452 = vsel %vm448, %v431, 0.0
        %v453 = vadd.f32 %v451, %v452
        %v454 = vrot.slane %v453, 4
        %v455 = vadd.f32 %v453, %v454
        %v456 = vrot.slane %v455, 2
        %v457 = vadd.f32 %v455, %v456
        %v458 = vrot.slane %v457, 1
        %v459 = vadd.f32 %v457, %v458
        %460 = vst.msk [vmem:[%s280] sm:$0xff] %vm448, %v459
        %v461 = vsel %vm448, %v444, 0.0
        %v462 = vsel %vm448, %v445, 0.0
        %v463 = vadd.f32 %v461, %v462
        %v464 = vrot.slane %v463, 4
        %v465 = vadd.f32 %v463, %v464
        %v466 = vrot.slane %v465, 2
        %v467 = vadd.f32 %v465, %v466
        %v468 = vrot.slane %v467, 1
        %v469 = vadd.f32 %v467, %v468
        %470 = vst.msk [vmem:[%s284] sm:$0xff] %vm448, %v469
        %s471 = smul.u32 2, %s16
        %p472 = scmp.lt.s32.totalorder %s471, 15
        %s473 = scalar_select %p472, %s471, 15
        %s474 = smul.addr %s473, 8
        %s475 = scalar_lea.vmem %s2, %s474
        %p476 = scmp.lt.s32.totalorder %s16, 7
        %s477 = scalar_select %p476, %s16, 7
        %s478 = smul.addr %s477, 8
        %s479 = scalar_lea.vmem %s3, %s478
        %p480 = scmp.lt.s32.totalorder %s16, 7
        %s481 = scalar_select %p480, %s16, 7
        %s482 = smul.addr %s481, 8
        %s483 = scalar_lea.vmem %s4, %s482
        // Predicated region
        $region67: #{tpu_custom_call.1} parent=61 // pred_check
          %p484 = pneg %p81
        $region68: #{tpu_custom_call.1} parent=61 // pred_check_branch
          %486 = sbr.rel (%p484) target = $region70
        $region69: #{tpu_custom_call.1} parent=61 // pred_region
          %s487 = smul.u32 2, %s16
        $region70: #{tpu_custom_call.1} parent=61 // pred_fallthru
          _
        // Predicated region
        $region71: #{tpu_custom_call.1} parent=61 // pred_check
          %p488 = pneg %p107
        $region72: #{tpu_custom_call.1} parent=61 // pred_check_branch
          %490 = sbr.rel (%p488) target = $region74
        $region73: #{tpu_custom_call.1} parent=61 // pred_region
          _
        $region74: #{tpu_custom_call.1} parent=61 // pred_fallthru
          _
        // Predicated region
        $region75: #{tpu_custom_call.1} parent=61 // pred_check
          %p491 = pneg %p133
        $region76: #{tpu_custom_call.1} parent=61 // pred_check_branch
          %493 = sbr.rel (%p491) target = $region78
        $region77: #{tpu_custom_call.1} parent=61 // pred_region
          _
        $region78: #{tpu_custom_call.1} parent=61 // pred_fallthru
          _
      $region62: #{tpu_custom_call.1} parent=5 // pred_fallthru
        _
      %p494 = scmp.le.s32.totalorder 2, %s11
      // Predicated region
      $region79: #{tpu_custom_call.1} parent=5 // pred_check
        %p495 = pneg %p494
      $region80: #{tpu_custom_call.1} parent=5 // pred_check_branch
        %497 = sbr.rel (%p495) target = $region82
      $region81: #{tpu_custom_call.1} parent=5 // pred_region
        %s498 = ssub.s32 %s11, 2
        // Predicated region
        $region83: #{tpu_custom_call.1} parent=81 // pred_check
          %p499 = pneg %p87
        $region84: #{tpu_custom_call.1} parent=81 // pred_check_branch
          %501 = sbr.rel (%p499) target = $region86
        $region85: #{tpu_custom_call.1} parent=81 // pred_region
          %s502 = smul.u32 2, %s17
          %p503 = scmp.lt.s32.totalorder %s502, 15
          %s504 = scalar_select %p503, %s502, 15
          %s505 = smul.addr %s504, 8
          %s506 = scalar_lea.vmem %s2, %s505
        $region86: #{tpu_custom_call.1} parent=81 // pred_fallthru
          _
        // Predicated region
        $region87: #{tpu_custom_call.1} parent=81 // pred_check
          %p507 = pneg %p113
        $region88: #{tpu_custom_call.1} parent=81 // pred_check_branch
          %509 = sbr.rel (%p507) target = $region90
        $region89: #{tpu_custom_call.1} parent=81 // pred_region
          %p510 = scmp.lt.s32.totalorder %s17, 7
          %s511 = scalar_select %p510, %s17, 7
          %s512 = smul.addr %s511, 8
          %s513 = scalar_lea.vmem %s3, %s512
        $region90: #{tpu_custom_call.1} parent=81 // pred_fallthru
          _
        // Predicated region
        $region91: #{tpu_custom_call.1} parent=81 // pred_check
          %p514 = pneg %p139
        $region92: #{tpu_custom_call.1} parent=81 // pred_check_branch
          %516 = sbr.rel (%p514) target = $region94
        $region93: #{tpu_custom_call.1} parent=81 // pred_region
          %p517 = scmp.lt.s32.totalorder %s17, 7
          %s518 = scalar_select %p517, %s17, 7
          %s519 = smul.addr %s518, 8
          %s520 = scalar_lea.vmem %s4, %s519
        $region94: #{tpu_custom_call.1} parent=81 // pred_fallthru
          _
      $region82: #{tpu_custom_call.1} parent=5 // pred_fallthru
        _
    $region6: #{tpu_custom_call.1} parent=1 // loop_footer
      %s15 = sadd.s32 1, %s11
    $region7: #{tpu_custom_call.1} parent=1 // loop_footer_branch
      %10 = sbr.rel target = $region3
    $region8: #{tpu_custom_call.1} parent=1 // loop_exit
      _

</llo_original>
